<compile_context>
chip_gen: v5e
topology: v5e:2x2
jax: 0.10.0
libtpu: 0.0.40
codegen_flags: <defaults>
</compile_context>

<pallas_src>
import jax
import jax.numpy as jnp
from jax.experimental import pallas as pl
from jax.experimental.pallas import tpu as pltpu

SUBLANE = 8  # f32 sublane count


def _round_up(v, m):
    return (v + m - 1) // m * m


def linear_relu_tanh_kernel(x_ref, w_ref, b_ref, o_ref):
    # x_ref: (TILE_N, IN)  w_ref: (IN, OUT)  b_ref: (1, OUT)  o_ref: (TILE_N, OUT)
    y = jnp.dot(x_ref[...], w_ref[...], preferred_element_type=jnp.float32)
    y = y + b_ref[...]                              # bias broadcast over rows (VPU)
    y = jnp.maximum(y, 0.0)                         # ReLU (VPU)
    o_ref[...] = jnp.tanh(y).astype(o_ref.dtype)    # tanh (EUP)


def linear_relu_tanh_pallas(x, w, b, *, tile_n=2048):
    """y = tanh(relu(x @ w.T + b)) via Pallas.

    x: (N, IN) f32, w: (OUT, IN) f32 (PyTorch Linear layout), b: (OUT,) f32.
    """
    N, IN = x.shape
    OUT = w.shape[0]

    # Sublane-aligned row tile; clamp for small N (block may exceed N: partial
    # block handling drops OOB stores).
    tile_n = max(SUBLANE, min(tile_n, _round_up(N, SUBLANE)))
    grid = (pl.cdiv(N, tile_n),)

    w_t = w.T                      # (IN, OUT) for x @ w.T
    b2 = b.reshape(1, OUT)

    out = pl.pallas_call(
        linear_relu_tanh_kernel,
        out_shape=jax.ShapeDtypeStruct((N, OUT), x.dtype),
        grid_spec=pl.GridSpec(
            grid=grid,
            in_specs=[
                pl.BlockSpec((tile_n, IN), lambda i: (i, 0)),   # x: row-tiled, unpadded K
                pl.BlockSpec((IN, OUT), lambda i: (0, 0)),      # w: VMEM-resident
                pl.BlockSpec((1, OUT), lambda i: (0, 0)),       # b: VMEM-resident
            ],
            out_specs=pl.BlockSpec((tile_n, OUT), lambda i: (i, 0)),
        ),
        compiler_params=pltpu.CompilerParams(
            dimension_semantics=("parallel",),   # rows independent -> both TCs on v7x
        ),
    )(x, w_t, b2)

    return out


def linear_relu_tanh(x, w, b, *, tile_n=2048, use_pallas=None):
    """Dispatcher: tiny row counts go to a fused XLA expression (cheaper than
    any pallas_call launch); large N uses the Pallas kernel."""
    N = x.shape[0]
    if use_pallas is None:
        use_pallas = N >= 4096
    if not use_pallas:
        return jnp.tanh(jnp.maximum(x @ w.T + b, 0.0))
    return linear_relu_tanh_pallas(x, w, b, tile_n=tile_n)


if __name__ == "__main__":
    key = jax.random.PRNGKey(0)
    kx, kw, kb, kx2 = jax.random.split(key, 4)

    IN_FEATURES, OUT_FEATURES, N = 4, 2, 10

    # Input, matching torch.randn(10, 4)
    x = jax.random.normal(kx, (N, IN_FEATURES), dtype=jnp.float32)

    # Deterministic Linear(4, 2) params (PyTorch-style uniform init bound)
    bound = 1.0 / (IN_FEATURES ** 0.5)
    w = jax.random.uniform(kw, (OUT_FEATURES, IN_FEATURES),
                           minval=-bound, maxval=bound, dtype=jnp.float32)
    b = jax.random.uniform(kb, (OUT_FEATURES,),
                           minval=-bound, maxval=bound, dtype=jnp.float32)

    def ref_fn(xx):
        return jnp.tanh(jnp.maximum(xx @ w.T + b, 0.0))

    # 1) Pallas path, demo shape (single partial block).
    out = linear_relu_tanh_pallas(x, w, b)
    jax.block_until_ready(out)
    ref = ref_fn(x)
    assert out.shape == ref.shape, "shape mismatch vs reference (N=10)"
    assert jnp.allclose(out, ref, atol=1e-5), "mismatch vs reference (N=10)"

    # 2) Pallas path, multi-block grid with a partial last block (300 rows, tile 128).
    x2 = jax.random.normal(kx2, (300, IN_FEATURES), dtype=jnp.float32)
    out2 = linear_relu_tanh_pallas(x2, w, b, tile_n=128)
    jax.block_until_ready(out2)
    ref2 = ref_fn(x2)
    assert out2.shape == ref2.shape, "shape mismatch vs reference (N=300)"
    assert jnp.allclose(out2, ref2, atol=1e-5), "mismatch vs reference (N=300)"

    # 3) Dispatcher default (small shape routes to fused XLA expression).
    out3 = linear_relu_tanh(x, w, b)
    jax.block_until_ready(out3)
    assert jnp.allclose(out3, ref, atol=1e-5), "dispatcher mismatch vs reference"

    print("KERNEL_OK")
</pallas_src>

<mosaic_0001>
module attributes {stable_mosaic.version = 11 : i64} {
  func.func @linear_relu_tanh_kernel(%arg0: i32, %arg1: memref<16x4xf32, #tpu.memory_space<vmem>>, %arg2: memref<4x2xf32, #tpu.memory_space<vmem>>, %arg3: memref<1x2xf32, #tpu.memory_space<vmem>>, %arg4: memref<16x2xf32, #tpu.memory_space<vmem>>) attributes {dimension_semantics = [#tpu.dimension_semantics<parallel>], iteration_bounds = array<i64: 1>, scalar_prefetch = 0 : i64, scratch_operands = 0 : i64, tpu.core_type = #tpu.core_type<tc>, window_params = [{transform_indices = @transform_0, window_bounds = array<i64: 16, 4>}, {pipeline_mode = #tpu.pipeline_mode<synchronous>, transform_indices = @transform_1, window_bounds = array<i64: 4, 2>}, {pipeline_mode = #tpu.pipeline_mode<synchronous>, transform_indices = @transform_2, window_bounds = array<i64: 1, 2>}, {transform_indices = @transform_3, window_bounds = array<i64: 16, 2>}]} {
    %c0 = arith.constant 0 : index
    %c0_0 = arith.constant 0 : index
    %0 = vector.load %arg1[%c0, %c0_0] : memref<16x4xf32, #tpu.memory_space<vmem>>, vector<16x4xf32>
    %c0_1 = arith.constant 0 : index
    %c0_2 = arith.constant 0 : index
    %1 = vector.load %arg2[%c0_1, %c0_2] : memref<4x2xf32, #tpu.memory_space<vmem>>, vector<4x2xf32>
    %cst = arith.constant dense<0.000000e+00> : vector<16x2xf32>
    %2 = tpu.matmul %0, %1, %cst {dimension_numbers = #tpu.dot_dimension_numbers<[1], [0], [0], [1], [0, 0, 1, 1], [], []>} : vector<16x4xf32>, vector<4x2xf32>, vector<16x2xf32> -> vector<16x2xf32>
    %c0_3 = arith.constant 0 : index
    %c0_4 = arith.constant 0 : index
    %3 = vector.load %arg3[%c0_3, %c0_4] : memref<1x2xf32, #tpu.memory_space<vmem>>, vector<1x2xf32>
    %4 = vector.broadcast %3 : vector<1x2xf32> to vector<16x2xf32>
    %5 = arith.addf %2, %4 : vector<16x2xf32>
    %cst_5 = arith.constant 0.000000e+00 : f32
    %6 = vector.broadcast %cst_5 : f32 to vector<16x2xf32>
    %7 = arith.maximumf %5, %6 : vector<16x2xf32>
    %8 = math.tanh %7 : vector<16x2xf32>
    %c0_6 = arith.constant 0 : index
    %c0_7 = arith.constant 0 : index
    %9 = vector.load %arg4[%c0_6, %c0_7] : memref<16x2xf32, #tpu.memory_space<vmem>>, vector<16x2xf32>
    tpu.vector_store %arg4[%c0_6, %c0_7], %8 {strides = array<i32>} : memref<16x2xf32, #tpu.memory_space<vmem>>, vector<16x2xf32>,
    return
  }
  func.func @transform_0(%arg0: i32) -> (i32, i32) {
    %c0_i32 = arith.constant 0 : i32
    %c0_i32_0 = arith.constant 0 : i32
    return %arg0, %c0_i32 : i32, i32
  }
  func.func @transform_1(%arg0: i32) -> (i32, i32) {
    %c0_i32 = arith.constant 0 : i32
    %c0_i32_0 = arith.constant 0 : i32
    %c0_i32_1 = arith.constant 0 : i32
    return %c0_i32, %c0_i32_0 : i32, i32
  }
  func.func @transform_2(%arg0: i32) -> (i32, i32) {
    %c0_i32 = arith.constant 0 : i32
    %c0_i32_0 = arith.constant 0 : i32
    %c0_i32_1 = arith.constant 0 : i32
    return %c0_i32, %c0_i32_0 : i32, i32
  }
  func.func @transform_3(%arg0: i32) -> (i32, i32) {
    %c0_i32 = arith.constant 0 : i32
    %c0_i32_0 = arith.constant 0 : i32
    return %arg0, %c0_i32 : i32, i32
  }
}

</mosaic_0001>

<llo_original>
// kernel: tpu_custom_call.1
$region0: #{tpu_custom_call.1}
  #allocation0 [shape = 'u32[]', space=smem, size = 0x4, offset = 0x4, fixed_abs, tag = 'smem constant byte address 0x4 - core index']
  #allocation1 [shape = 'u32[72,128]{1,0:T(1,128)}', space=vmem, size = 0x9000, scoped, tag = 'internal scratch']
  %s0 = inlined_call_operand.vmem [shape: f32[10,4], index: 0, kind: input, shape index: {}]
  %s1 = inlined_call_operand.vmem [shape: f32[4,2], index: 1, kind: input, shape index: {}]
  %s2 = inlined_call_operand.vmem [shape: f32[1,2], index: 2, kind: input, shape index: {}]
  %s3 = inlined_call_operand.vmem [shape: f32[10,2], index: 3, kind: output, shape index: {}]
  %s4 = sld [smem:[#allocation0]]
  $region22: #{tpu_custom_call.1} parent=0
    _
  %s6 = ssub.s32 1, %s4
  %s7 = scalar_select 0, %s6, %s4
  // Predicated region
  $region2: #{tpu_custom_call.1} parent=0 // pred_check
    _
  $region3: #{tpu_custom_call.1} parent=0 // pred_check_branch
    %9 = sbr.rel (0) target = $region5
  $region4: #{tpu_custom_call.1} parent=0 // pred_region
    _
  $region5: #{tpu_custom_call.1} parent=0 // pred_fallthru
    _
  // Predicated region
  $region6: #{tpu_custom_call.1} parent=0 // pred_check
    _
  $region7: #{tpu_custom_call.1} parent=0 // pred_check_branch
    %11 = sbr.rel (0) target = $region9
  $region8: #{tpu_custom_call.1} parent=0 // pred_region
    _
  $region9: #{tpu_custom_call.1} parent=0 // pred_fallthru
    _
  // Predicated region
  $region10: #{tpu_custom_call.1} parent=0 // pred_check
    _
  $region11: #{tpu_custom_call.1} parent=0 // pred_check_branch
    %13 = sbr.rel (0) target = $region13
  $region12: #{tpu_custom_call.1} parent=0 // pred_region
    _
  $region13: #{tpu_custom_call.1} parent=0 // pred_fallthru
    _
  %v14 = vld [vmem:[%s0] sm:$0xff]
  %v15 = vld [vmem:[%s0 + $0x8] sm:$0xff]
  %v16 = vld [vmem:[%s1] sm:$0xf]
  %v17 = vld [vmem:[%s2] sm:$0x1]
  %v19 = vperm.slane %v17, 0
  %vm21 = vcmask 31744
  %v23 = vsel %vm21, %v14, 0
  %v26 = vsel %vm21, %v15, 0
  %vm28 = vcmask 1043456
  %v30 = vsel %vm28, %v16, 0
  %32 = vmatpush.msra.mxu0 0.0
  %33 = vmatpush.msra.mxu0 0.0
  %34 = vmatpush.msra.mxu0 0.0
  %35 = vmatpush.msra.mxu0 0.0
  %36 = vmatpush.msra.mxu0 0.0
  %37 = vmatpush.msra.mxu0 0.0
  %38 = vmatpush.msra.mxu0 0.0
  %39 = vmatpush.msra.mxu0 0.0
  %40 = vmatpush.msra.mxu0 0.0
  %41 = vmatpush.msra.mxu0 0.0
  %42 = vmatpush.msra.mxu0 0.0
  %43 = vmatpush.msra.mxu0 0.0
  %44 = vmatpush.msra.mxu0 0.0
  %45 = vmatpush.msra.mxu0 0.0
  %46 = vmatpush.msra.mxu0 0.0
  %47 = vmatpush.msra.mxu0 %v30
  %48 = vmatmul.f32.gmra.mxu0 %v23
  %v49 = vpop.f32.mrf.mxu0
  %v50 = vadd.f32 %v19, %v49
  %51 = vmatmul.f32.gmra.mxu0 %v26
  %v52 = vpop.f32.mrf.mxu0
  %v53 = vadd.f32 %v19, %v52
  %54 = vdwg.mxu0
  %v55 = vmax.f32 %v50, 0.0
  %v56 = vmax.f32 %v53, 0.0
  %v57 = vtanh.pop %v55
  %v58 = vtanh.pop %v56
  %vm59 = vcmask 15360
  %60 = vst.msk [vmem:[%s3] sm:$0xff] %vm59, %v57
  %61 = vst.msk [vmem:[%s3 + $0x8] sm:$0xff] %vm59, %v58
  // Predicated region
  $region14: #{tpu_custom_call.1} parent=0 // pred_check
    _
  $region15: #{tpu_custom_call.1} parent=0 // pred_check_branch
    %63 = sbr.rel (0) target = $region17
  $region16: #{tpu_custom_call.1} parent=0 // pred_region
    _
  $region17: #{tpu_custom_call.1} parent=0 // pred_fallthru
    _
  // Predicated region
  $region18: #{tpu_custom_call.1} parent=0 // pred_check
    _
  $region19: #{tpu_custom_call.1} parent=0 // pred_check_branch
    %65 = sbr.rel (0) target = $region21
  $region20: #{tpu_custom_call.1} parent=0 // pred_region
    _
  $region21: #{tpu_custom_call.1} parent=0 // pred_fallthru
    _

</llo_original>
